<compile_context>
chip_gen: v5e
topology: v5e:2x2
jax: 0.10.0
libtpu: 0.0.40
codegen_flags: <defaults>
</compile_context>

<pallas_src>
import functools
import jax
import jax.numpy as jnp
from jax.experimental import pallas as pl
from jax.experimental.pallas import tpu as pltpu


def _bottleneck_kernel(pp, wp, w_img, cin, cint, cout,
                       grid_ref, xph_ref,
                       w1_ref, b1_ref, w2_ref, b2_ref, w3_ref, b3_ref,
                       out_ref, ind_ref):
    """Works on one batch element in channel-major (C, Pp) layout.

    Pp = (Ho+2)*(Wo+2) is the flattened output grid padded by one pixel on every
    side; pad cells hold -inf in xph and are stripped by the wrapper.
    grid_ref[0, p] = 2*W*row + 2*col at valid cells, -1 at pad cells.
    """
    x = xph_ref[0]                       # (4*Cin, Pp), -inf at padded cells
    base = grid_ref[...]                 # (1, Pp) int32
    validb = base >= 0                   # (1, Pp) bool: inside the Ho x Wo grid

    def shift(a, s):
        # G[:, p] = a[:, p + s]; |s| <= wp+1, so wrap filler only lands in pads.
        if s == 0:
            return a
        if s > 0:
            return jnp.concatenate([a[:, s:], a[:, :s]], axis=1)
        k = -s
        return jnp.concatenate([a[:, pp - k:], a[:, :pp - k]], axis=1)

    # ---- main branch: 3x3 / stride-2 / pad-1 max pool + flat argmax indices ----
    # phase planes: 0=(even row, even col), 1=(even,odd), 2=(odd,even), 3=(odd,odd)
    # taps listed in PyTorch window row-major order (kh, kw) so the first max wins.
    tap_defs = (
        (3, -(wp + 1), 0, 0), (2, -wp, 0, 1), (3, -wp, 0, 2),
        (1, -1,        1, 0), (0, 0,   1, 1), (1, 0,   1, 2),
        (3, -1,        2, 0), (2, 0,   2, 1), (3, 0,   2, 2),
    )
    best_v = None
    best_i = None
    for (ph, s, kh, kw) in tap_defs:
        v = shift(x[ph * cin:(ph + 1) * cin, :], s)          # (Cin, Pp)
        idx_t = base + ((kh - 3) * w_img + (kw - 3))         # (1, Pp) int32
        if best_v is None:
            best_v = v
            best_i = jnp.broadcast_to(idx_t, (cin, pp))
        else:
            take = v > best_v                                # strict > : first max wins
            best_v = jnp.where(take, v, best_v)
            best_i = jnp.where(take, idx_t, best_i)
    ind_ref[0] = best_i

    # ---- ext 1: 2x2 stride-2 conv == one matmul over the 4 phase planes ----
    xz = jnp.where(validb, x, 0.0)                           # keep -inf off the MXU
    h1 = jnp.dot(w1_ref[...], xz, preferred_element_type=jnp.float32)
    h1 = jnp.maximum(h1 + b1_ref[...], 0.0)                  # (Cint, Pp)
    h1 = jnp.where(validb, h1, 0.0)                          # zero padding ring for conv2

    # ---- ext 2: 3x3/p1 conv as ONE matmul over K = 9*Cint (in-register im2col) ----
    im2 = jnp.concatenate(
        [shift(h1, (kh - 1) * wp + (kw - 1))
         for kh in range(3) for kw in range(3)], axis=0)     # (9*Cint, Pp)
    h2 = jnp.dot(w2_ref[...], im2, preferred_element_type=jnp.float32)
    h2 = jnp.maximum(h2 + b2_ref[...], 0.0)                  # (Cint, Pp)

    # ---- ext 3: 1x1 conv + shift + Dropout(eval => identity) + ReLU ----
    h3 = jnp.dot(w3_ref[...], h2, preferred_element_type=jnp.float32)
    ext = jnp.maximum(h3 + b3_ref[...], 0.0)                 # (Cout, Pp)

    # ---- combine: main zero-padded to Cout channels, single store ----
    if cout > cin:
        main_pad = jnp.concatenate(
            [best_v, jnp.zeros((cout - cin, pp), jnp.float32)], axis=0)
    else:
        main_pad = best_v
    out_ref[0] = ext + main_pad


def downsampling_bottleneck(x_nchw, params):
    w1, s1, b1, w2, s2, b2, w3, s3, b3 = params
    n, cin, h, w = x_nchw.shape
    cint = w1.shape[-1]
    cout = w3.shape[-1]
    assert cout >= cin, "main-branch zero padding assumes out_channels >= in_channels"
    ho, wo = h // 2, w // 2
    hp, wp = ho + 2, wo + 2
    pp = hp * wp

    x = x_nchw.astype(jnp.float32)

    # Space-to-depth phase planes (exactly one relayout of the input), padded by
    # one output-grid pixel with -inf (max-pool padding), flat spatial axis last.
    phases = jnp.concatenate(
        [x[:, :, 0::2, 0::2], x[:, :, 0::2, 1::2],
         x[:, :, 1::2, 0::2], x[:, :, 1::2, 1::2]], axis=1)          # (N, 4Cin, Ho, Wo)
    xph = jnp.pad(phases, ((0, 0), (0, 0), (1, 1), (1, 1)),
                  constant_values=jnp.float32(-jnp.inf)).reshape(n, 4 * cin, pp)

    # Shared spatial bookkeeping: 2*W*row + 2*col at valid cells, -1 at pad cells.
    rows = jnp.arange(hp, dtype=jnp.int32)[:, None]
    cols = jnp.arange(wp, dtype=jnp.int32)[None, :]
    valid = (rows >= 1) & (rows <= ho) & (cols >= 1) & (cols <= wo)
    grid_idx = jnp.where(valid, 2 * w * rows + 2 * cols,
                         jnp.int32(-1)).reshape(1, pp)

    # Fold the BatchNorm scale into the conv weights; keep only the shift.
    # TODO(synk): cast weights/activations to bf16 for the matmuls on v6e/v7x.
    w1t = (w1 * s1[0]).reshape(4 * cin, cint).T.astype(jnp.float32)   # (Cint, 4Cin)
    w2t = (w2 * s2[0]).reshape(9 * cint, cint).T.astype(jnp.float32)  # (Cint, 9Cint)
    w3t = (w3 * s3[0]).T.astype(jnp.float32)                          # (Cout, Cint)
    b1c = b1.reshape(cint, 1)
    b2c = b2.reshape(cint, 1)
    b3c = b3.reshape(cout, 1)

    kernel = functools.partial(_bottleneck_kernel, pp, wp, w, cin, cint, cout)
    # TODO(synk): add a lane-aligned spatial grid axis (with a 1-pixel h1 halo)
    # so per-step blocks also fit v7x's 64 MiB VMEM at full ENet resolutions.
    out, ind = pl.pallas_call(
        kernel,
        out_shape=(jax.ShapeDtypeStruct((n, cout, pp), jnp.float32),
                   jax.ShapeDtypeStruct((n, cin, pp), jnp.int32)),
        grid_spec=pltpu.PrefetchScalarGridSpec(
            num_scalar_prefetch=0,
            grid=(n,),
            in_specs=[
                pl.BlockSpec((1, pp), lambda b: (0, 0)),               # grid_idx
                pl.BlockSpec((1, 4 * cin, pp), lambda b: (b, 0, 0)),   # phase planes
                pl.BlockSpec((cint, 4 * cin), lambda b: (0, 0)),       # w1t
                pl.BlockSpec((cint, 1), lambda b: (0, 0)),             # b1
                pl.BlockSpec((cint, 9 * cint), lambda b: (0, 0)),      # w2t
                pl.BlockSpec((cint, 1), lambda b: (0, 0)),             # b2
                pl.BlockSpec((cout, cint), lambda b: (0, 0)),          # w3t
                pl.BlockSpec((cout, 1), lambda b: (0, 0)),             # b3
            ],
            out_specs=[
                pl.BlockSpec((1, cout, pp), lambda b: (b, 0, 0)),
                pl.BlockSpec((1, cin, pp), lambda b: (b, 0, 0)),
            ],
        ),
        compiler_params=pltpu.CompilerParams(dimension_semantics=("parallel",)),
    )(grid_idx, xph, w1t, b1c, w2t, b2c, w3t, b3c)

    out_nchw = out.reshape(n, cout, hp, wp)[:, :, 1:ho + 1, 1:wo + 1]
    ind_nchw = ind.reshape(n, cin, hp, wp)[:, :, 1:ho + 1, 1:wo + 1]
    return out_nchw, ind_nchw


def make_params(key, cin, cout, ratio):
    cint = cin // ratio
    ks = jax.random.split(key, 6)

    def bn_fold(k, c):
        k1, k2, k3, k4 = jax.random.split(k, 4)
        gamma = 1.0 + 0.1 * jax.random.normal(k1, (c,), jnp.float32)
        beta = 0.1 * jax.random.normal(k2, (c,), jnp.float32)
        mean = 0.05 * jax.random.normal(k3, (c,), jnp.float32)
        var = 1.0 + 0.1 * jax.random.uniform(k4, (c,), jnp.float32)
        scale = gamma * jax.lax.rsqrt(var + 1e-5)
        shift = beta - mean * scale
        return scale.reshape(1, c), shift.reshape(1, c)

    w1 = 0.3 * jax.random.normal(ks[0], (2, 2, cin, cint), jnp.float32)   # HWIO
    w2 = 0.3 * jax.random.normal(ks[1], (3, 3, cint, cint), jnp.float32)  # HWIO
    w3 = 0.3 * jax.random.normal(ks[2], (cint, cout), jnp.float32)        # 1x1
    s1, b1 = bn_fold(ks[3], cint)
    s2, b2 = bn_fold(ks[4], cint)
    s3, b3 = bn_fold(ks[5], cout)
    return (w1, s1, b1, w2, s2, b2, w3, s3, b3)


def reference(x_nchw, params):
    """Plain-JAX reference (lax.conv / reduce_window) for verification."""
    w1, s1, b1, w2, s2, b2, w3, s3, b3 = params
    x = jnp.transpose(x_nchw, (0, 2, 3, 1)).astype(jnp.float32)
    main = jax.lax.reduce_window(x, jnp.float32(-jnp.inf), jax.lax.max,
                                 (1, 3, 3, 1), (1, 2, 2, 1),
                                 ((0, 0), (1, 1), (1, 1), (0, 0)))

    def conv(v, wgt, stride, pad):
        return jax.lax.conv_general_dilated(
            v, wgt, (stride, stride), [(pad, pad), (pad, pad)],
            dimension_numbers=('NHWC', 'HWIO', 'NHWC'))

    e = jax.nn.relu(conv(x, w1, 2, 0) * s1[0] + b1[0])
    e = jax.nn.relu(conv(e, w2, 1, 1) * s2[0] + b2[0])
    e = jax.nn.relu(conv(e, w3.reshape(1, 1, *w3.shape), 1, 0) * s3[0] + b3[0])
    n, ho, wo, cout = e.shape
    cin = main.shape[-1]
    main_p = jnp.concatenate(
        [main, jnp.zeros((n, ho, wo, cout - cin), e.dtype)], axis=-1)
    out = (main_p + e).transpose(0, 3, 1, 2)
    return out, main.transpose(0, 3, 1, 2)


if __name__ == "__main__":
    key = jax.random.PRNGKey(0)
    n, cin, h, w = 2, 4, 16, 16
    cout, ratio = 8, 2

    kx, kp = jax.random.split(key)
    x = jax.random.normal(kx, (n, cin, h, w), jnp.float32)
    params = make_params(kp, cin, cout, ratio)

    out, idx = downsampling_bottleneck(x, params)
    out = jax.block_until_ready(out)
    idx = jax.block_until_ready(idx)

    # Verify against plain-JAX reference.
    out_r, main_r = reference(x, params)
    assert out.shape == (n, cout, h // 2, w // 2)
    assert idx.shape == (n, cin, h // 2, w // 2)
    assert jnp.allclose(out, out_r, atol=1e-4, rtol=1e-4), "output mismatch"
    gathered = jnp.take_along_axis(x.reshape(n, cin, h * w),
                                   idx.reshape(n, cin, -1), axis=2)
    assert jnp.allclose(gathered, main_r.reshape(n, cin, -1), atol=1e-5), \
        "pool indices do not point at window maxima"

    print("KERNEL_OK")
</pallas_src>

<mosaic_0001>
module attributes {stable_mosaic.version = 11 : i64} {
  func.func @_bottleneck_kernel(%arg0: i32, %arg1: memref<1x100xi32, #tpu.memory_space<vmem>>, %arg2: memref<1x16x100xf32, #tpu.memory_space<vmem>>, %arg3: memref<2x16xf32, #tpu.memory_space<vmem>>, %arg4: memref<2x1xf32, #tpu.memory_space<vmem>>, %arg5: memref<2x18xf32, #tpu.memory_space<vmem>>, %arg6: memref<2x1xf32, #tpu.memory_space<vmem>>, %arg7: memref<8x2xf32, #tpu.memory_space<vmem>>, %arg8: memref<8x1xf32, #tpu.memory_space<vmem>>, %arg9: memref<1x8x100xf32, #tpu.memory_space<vmem>>, %arg10: memref<1x4x100xi32, #tpu.memory_space<vmem>>) attributes {dimension_semantics = [#tpu.dimension_semantics<parallel>], iteration_bounds = array<i64: 2>, scalar_prefetch = 0 : i64, scratch_operands = 0 : i64, tpu.core_type = #tpu.core_type<tc>, window_params = [{pipeline_mode = #tpu.pipeline_mode<synchronous>, transform_indices = @transform_0, window_bounds = array<i64: 1, 100>}, {transform_indices = @transform_1, window_bounds = array<i64: 1, 16, 100>}, {pipeline_mode = #tpu.pipeline_mode<synchronous>, transform_indices = @transform_2, window_bounds = array<i64: 2, 16>}, {pipeline_mode = #tpu.pipeline_mode<synchronous>, transform_indices = @transform_3, window_bounds = array<i64: 2, 1>}, {pipeline_mode = #tpu.pipeline_mode<synchronous>, transform_indices = @transform_4, window_bounds = array<i64: 2, 18>}, {pipeline_mode = #tpu.pipeline_mode<synchronous>, transform_indices = @transform_5, window_bounds = array<i64: 2, 1>}, {pipeline_mode = #tpu.pipeline_mode<synchronous>, transform_indices = @transform_6, window_bounds = array<i64: 8, 2>}, {pipeline_mode = #tpu.pipeline_mode<synchronous>, transform_indices = @transform_7, window_bounds = array<i64: 8, 1>}, {transform_indices = @transform_8, window_bounds = array<i64: 1, 8, 100>}, {transform_indices = @transform_9, window_bounds = array<i64: 1, 4, 100>}]} {
    %c0 = arith.constant 0 : index
    %c0_0 = arith.constant 0 : index
    %c0_1 = arith.constant 0 : index
    %0 = vector.load %arg2[%c0, %c0_0, %c0_1] : memref<1x16x100xf32, #tpu.memory_space<vmem>>, vector<1x16x100xf32>
    %1 = vector.shape_cast %0 : vector<1x16x100xf32> to vector<16x100xf32>
    %c0_2 = arith.constant 0 : index
    %c0_3 = arith.constant 0 : index
    %2 = vector.load %arg1[%c0_2, %c0_3] : memref<1x100xi32, #tpu.memory_space<vmem>>, vector<1x100xi32>
    %c0_i32 = arith.constant 0 : i32
    %3 = vector.broadcast %c0_i32 : i32 to vector<1x100xi32>
    %4 = arith.cmpi sge, %2, %3 : vector<1x100xi32>
    %5 = vector.extract_strided_slice %1 {offsets = [12, 0], sizes = [4, 100], strides = [1, 1]} : vector<16x100xf32> to vector<4x100xf32>
    %6 = vector.extract_strided_slice %5 {offsets = [0, 89], sizes = [4, 11], strides = [1, 1]} : vector<4x100xf32> to vector<4x11xf32>
    %7 = vector.extract_strided_slice %5 {offsets = [0, 0], sizes = [4, 89], strides = [1, 1]} : vector<4x100xf32> to vector<4x89xf32>
    %8 = tpu.concatenate %6, %7 in 1 : vector<4x11xf32>, vector<4x89xf32> -> vector<4x100xf32>
    %c-51_i32 = arith.constant -51 : i32
    %9 = vector.broadcast %c-51_i32 : i32 to vector<1x100xi32>
    %10 = arith.addi %2, %9 : vector<1x100xi32>
    %11 = vector.shape_cast %10 : vector<1x100xi32> to vector<1x100xi32>
    %12 = vector.broadcast %11 : vector<1x100xi32> to vector<4x100xi32>
    %13 = vector.extract_strided_slice %1 {offsets = [8, 0], sizes = [4, 100], strides = [1, 1]} : vector<16x100xf32> to vector<4x100xf32>
    %14 = vector.extract_strided_slice %13 {offsets = [0, 90], sizes = [4, 10], strides = [1, 1]} : vector<4x100xf32> to vector<4x10xf32>
    %15 = vector.extract_strided_slice %13 {offsets = [0, 0], sizes = [4, 90], strides = [1, 1]} : vector<4x100xf32> to vector<4x90xf32>
    %16 = tpu.concatenate %14, %15 in 1 : vector<4x10xf32>, vector<4x90xf32> -> vector<4x100xf32>
    %c-50_i32 = arith.constant -50 : i32
    %17 = vector.broadcast %c-50_i32 : i32 to vector<1x100xi32>
    %18 = arith.addi %2, %17 : vector<1x100xi32>
    %19 = arith.cmpf ogt, %16, %8 : vector<4x100xf32>
    %20 = arith.select %19, %16, %8 : vector<4x100xi1>, vector<4x100xf32>
    %21 = vector.shape_cast %18 : vector<1x100xi32> to vector<1x100xi32>
    %22 = vector.broadcast %21 : vector<1x100xi32> to vector<4x100xi32>
    %23 = arith.select %19, %22, %12 : vector<4x100xi1>, vector<4x100xi32>
    %24 = vector.extract_strided_slice %1 {offsets = [12, 0], sizes = [4, 100], strides = [1, 1]} : vector<16x100xf32> to vector<4x100xf32>
    %25 = vector.extract_strided_slice %24 {offsets = [0, 90], sizes = [4, 10], strides = [1, 1]} : vector<4x100xf32> to vector<4x10xf32>
    %26 = vector.extract_strided_slice %24 {offsets = [0, 0], sizes = [4, 90], strides = [1, 1]} : vector<4x100xf32> to vector<4x90xf32>
    %27 = tpu.concatenate %25, %26 in 1 : vector<4x10xf32>, vector<4x90xf32> -> vector<4x100xf32>
    %c-49_i32 = arith.constant -49 : i32
    %28 = vector.broadcast %c-49_i32 : i32 to vector<1x100xi32>
    %29 = arith.addi %2, %28 : vector<1x100xi32>
    %30 = arith.cmpf ogt, %27, %20 : vector<4x100xf32>
    %31 = arith.select %30, %27, %20 : vector<4x100xi1>, vector<4x100xf32>
    %32 = vector.shape_cast %29 : vector<1x100xi32> to vector<1x100xi32>
    %33 = vector.broadcast %32 : vector<1x100xi32> to vector<4x100xi32>
    %34 = arith.select %30, %33, %23 : vector<4x100xi1>, vector<4x100xi32>
    %35 = vector.extract_strided_slice %1 {offsets = [4, 0], sizes = [4, 100], strides = [1, 1]} : vector<16x100xf32> to vector<4x100xf32>
    %36 = vector.extract_strided_slice %35 {offsets = [0, 99], sizes = [4, 1], strides = [1, 1]} : vector<4x100xf32> to vector<4x1xf32>
    %37 = vector.extract_strided_slice %35 {offsets = [0, 0], sizes = [4, 99], strides = [1, 1]} : vector<4x100xf32> to vector<4x99xf32>
    %38 = tpu.concatenate %36, %37 in 1 : vector<4x1xf32>, vector<4x99xf32> -> vector<4x100xf32>
    %c-35_i32 = arith.constant -35 : i32
    %39 = vector.broadcast %c-35_i32 : i32 to vector<1x100xi32>
    %40 = arith.addi %2, %39 : vector<1x100xi32>
    %41 = arith.cmpf ogt, %38, %31 : vector<4x100xf32>
    %42 = arith.select %41, %38, %31 : vector<4x100xi1>, vector<4x100xf32>
    %43 = vector.shape_cast %40 : vector<1x100xi32> to vector<1x100xi32>
    %44 = vector.broadcast %43 : vector<1x100xi32> to vector<4x100xi32>
    %45 = arith.select %41, %44, %34 : vector<4x100xi1>, vector<4x100xi32>
    %46 = vector.extract_strided_slice %1 {offsets = [0, 0], sizes = [4, 100], strides = [1, 1]} : vector<16x100xf32> to vector<4x100xf32>
    %c-34_i32 = arith.constant -34 : i32
    %47 = vector.broadcast %c-34_i32 : i32 to vector<1x100xi32>
    %48 = arith.addi %2, %47 : vector<1x100xi32>
    %49 = arith.cmpf ogt, %46, %42 : vector<4x100xf32>
    %50 = arith.select %49, %46, %42 : vector<4x100xi1>, vector<4x100xf32>
    %51 = vector.shape_cast %48 : vector<1x100xi32> to vector<1x100xi32>
    %52 = vector.broadcast %51 : vector<1x100xi32> to vector<4x100xi32>
    %53 = arith.select %49, %52, %45 : vector<4x100xi1>, vector<4x100xi32>
    %54 = vector.extract_strided_slice %1 {offsets = [4, 0], sizes = [4, 100], strides = [1, 1]} : vector<16x100xf32> to vector<4x100xf32>
    %c-33_i32 = arith.constant -33 : i32
    %55 = vector.broadcast %c-33_i32 : i32 to vector<1x100xi32>
    %56 = arith.addi %2, %55 : vector<1x100xi32>
    %57 = arith.cmpf ogt, %54, %50 : vector<4x100xf32>
    %58 = arith.select %57, %54, %50 : vector<4x100xi1>, vector<4x100xf32>
    %59 = vector.shape_cast %56 : vector<1x100xi32> to vector<1x100xi32>
    %60 = vector.broadcast %59 : vector<1x100xi32> to vector<4x100xi32>
    %61 = arith.select %57, %60, %53 : vector<4x100xi1>, vector<4x100xi32>
    %62 = vector.extract_strided_slice %1 {offsets = [12, 0], sizes = [4, 100], strides = [1, 1]} : vector<16x100xf32> to vector<4x100xf32>
    %63 = vector.extract_strided_slice %62 {offsets = [0, 99], sizes = [4, 1], strides = [1, 1]} : vector<4x100xf32> to vector<4x1xf32>
    %64 = vector.extract_strided_slice %62 {offsets = [0, 0], sizes = [4, 99], strides = [1, 1]} : vector<4x100xf32> to vector<4x99xf32>
    %65 = tpu.concatenate %63, %64 in 1 : vector<4x1xf32>, vector<4x99xf32> -> vector<4x100xf32>
    %c-19_i32 = arith.constant -19 : i32
    %66 = vector.broadcast %c-19_i32 : i32 to vector<1x100xi32>
    %67 = arith.addi %2, %66 : vector<1x100xi32>
    %68 = arith.cmpf ogt, %65, %58 : vector<4x100xf32>
    %69 = arith.select %68, %65, %58 : vector<4x100xi1>, vector<4x100xf32>
    %70 = vector.shape_cast %67 : vector<1x100xi32> to vector<1x100xi32>
    %71 = vector.broadcast %70 : vector<1x100xi32> to vector<4x100xi32>
    %72 = arith.select %68, %71, %61 : vector<4x100xi1>, vector<4x100xi32>
    %73 = vector.extract_strided_slice %1 {offsets = [8, 0], sizes = [4, 100], strides = [1, 1]} : vector<16x100xf32> to vector<4x100xf32>
    %c-18_i32 = arith.constant -18 : i32
    %74 = vector.broadcast %c-18_i32 : i32 to vector<1x100xi32>
    %75 = arith.addi %2, %74 : vector<1x100xi32>
    %76 = arith.cmpf ogt, %73, %69 : vector<4x100xf32>
    %77 = arith.select %76, %73, %69 : vector<4x100xi1>, vector<4x100xf32>
    %78 = vector.shape_cast %75 : vector<1x100xi32> to vector<1x100xi32>
    %79 = vector.broadcast %78 : vector<1x100xi32> to vector<4x100xi32>
    %80 = arith.select %76, %79, %72 : vector<4x100xi1>, vector<4x100xi32>
    %81 = vector.extract_strided_slice %1 {offsets = [12, 0], sizes = [4, 100], strides = [1, 1]} : vector<16x100xf32> to vector<4x100xf32>
    %c-17_i32 = arith.constant -17 : i32
    %82 = vector.broadcast %c-17_i32 : i32 to vector<1x100xi32>
    %83 = arith.addi %2, %82 : vector<1x100xi32>
    %84 = arith.cmpf ogt, %81, %77 : vector<4x100xf32>
    %85 = arith.select %84, %81, %77 : vector<4x100xi1>, vector<4x100xf32>
    %86 = vector.shape_cast %83 : vector<1x100xi32> to vector<1x100xi32>
    %87 = vector.broadcast %86 : vector<1x100xi32> to vector<4x100xi32>
    %88 = arith.select %84, %87, %80 : vector<4x100xi1>, vector<4x100xi32>
    %c0_4 = arith.constant 0 : index
    %c0_5 = arith.constant 0 : index
    %c0_6 = arith.constant 0 : index
    %89 = vector.load %arg10[%c0_4, %c0_5, %c0_6] : memref<1x4x100xi32, #tpu.memory_space<vmem>>, vector<1x4x100xi32>
    %90 = vector.shape_cast %89 : vector<1x4x100xi32> to vector<4x100xi32>
    %91 = vector.shape_cast %88 : vector<4x100xi32> to vector<1x4x100xi32>
    tpu.vector_store %arg10[%c0_4, %c0_5, %c0_6], %91 {strides = array<i32>} : memref<1x4x100xi32, #tpu.memory_space<vmem>>, vector<1x4x100xi32>,
    %cst = arith.constant 0.000000e+00 : f32
    %92 = vector.shape_cast %4 : vector<1x100xi1> to vector<1x100xi1>
    %93 = vector.broadcast %92 : vector<1x100xi1> to vector<16x100xi1>
    %94 = vector.broadcast %cst : f32 to vector<16x100xf32>
    %95 = arith.select %93, %1, %94 : vector<16x100xi1>, vector<16x100xf32>
    %c0_7 = arith.constant 0 : index
    %c0_8 = arith.constant 0 : index
    %96 = vector.load %arg3[%c0_7, %c0_8] : memref<2x16xf32, #tpu.memory_space<vmem>>, vector<2x16xf32>
    %cst_9 = arith.constant dense<0.000000e+00> : vector<2x100xf32>
    %97 = tpu.matmul %96, %95, %cst_9 {dimension_numbers = #tpu.dot_dimension_numbers<[1], [0], [0], [1], [0, 0, 1, 1], [], []>} : vector<2x16xf32>, vector<16x100xf32>, vector<2x100xf32> -> vector<2x100xf32>
    %c0_10 = arith.constant 0 : index
    %c0_11 = arith.constant 0 : index
    %98 = vector.load %arg4[%c0_10, %c0_11] : memref<2x1xf32, #tpu.memory_space<vmem>>, vector<2x1xf32>
    %99 = vector.broadcast %98 : vector<2x1xf32> to vector<2x100xf32>
    %100 = arith.addf %97, %99 : vector<2x100xf32>
    %cst_12 = arith.constant 0.000000e+00 : f32
    %101 = vector.broadcast %cst_12 : f32 to vector<2x100xf32>
    %102 = arith.maximumf %100, %101 : vector<2x100xf32>
    %cst_13 = arith.constant 0.000000e+00 : f32
    %103 = vector.shape_cast %4 : vector<1x100xi1> to vector<1x100xi1>
    %104 = vector.broadcast %103 : vector<1x100xi1> to vector<2x100xi1>
    %105 = vector.broadcast %cst_13 : f32 to vector<2x100xf32>
    %106 = arith.select %104, %102, %105 : vector<2x100xi1>, vector<2x100xf32>
    %107 = vector.extract_strided_slice %106 {offsets = [0, 89], sizes = [2, 11], strides = [1, 1]} : vector<2x100xf32> to vector<2x11xf32>
    %108 = vector.extract_strided_slice %106 {offsets = [0, 0], sizes = [2, 89], strides = [1, 1]} : vector<2x100xf32> to vector<2x89xf32>
    %109 = tpu.concatenate %107, %108 in 1 : vector<2x11xf32>, vector<2x89xf32> -> vector<2x100xf32>
    %110 = vector.extract_strided_slice %106 {offsets = [0, 90], sizes = [2, 10], strides = [1, 1]} : vector<2x100xf32> to vector<2x10xf32>
    %111 = vector.extract_strided_slice %106 {offsets = [0, 0], sizes = [2, 90], strides = [1, 1]} : vector<2x100xf32> to vector<2x90xf32>
    %112 = tpu.concatenate %110, %111 in 1 : vector<2x10xf32>, vector<2x90xf32> -> vector<2x100xf32>
    %113 = vector.extract_strided_slice %106 {offsets = [0, 91], sizes = [2, 9], strides = [1, 1]} : vector<2x100xf32> to vector<2x9xf32>
    %114 = vector.extract_strided_slice %106 {offsets = [0, 0], sizes = [2, 91], strides = [1, 1]} : vector<2x100xf32> to vector<2x91xf32>
    %115 = tpu.concatenate %113, %114 in 1 : vector<2x9xf32>, vector<2x91xf32> -> vector<2x100xf32>
    %116 = vector.extract_strided_slice %106 {offsets = [0, 99], sizes = [2, 1], strides = [1, 1]} : vector<2x100xf32> to vector<2x1xf32>
    %117 = vector.extract_strided_slice %106 {offsets = [0, 0], sizes = [2, 99], strides = [1, 1]} : vector<2x100xf32> to vector<2x99xf32>
    %118 = tpu.concatenate %116, %117 in 1 : vector<2x1xf32>, vector<2x99xf32> -> vector<2x100xf32>
    %119 = vector.extract_strided_slice %106 {offsets = [0, 1], sizes = [2, 99], strides = [1, 1]} : vector<2x100xf32> to vector<2x99xf32>
    %120 = vector.extract_strided_slice %106 {offsets = [0, 0], sizes = [2, 1], strides = [1, 1]} : vector<2x100xf32> to vector<2x1xf32>
    %121 = tpu.concatenate %119, %120 in 1 : vector<2x99xf32>, vector<2x1xf32> -> vector<2x100xf32>
    %122 = vector.extract_strided_slice %106 {offsets = [0, 9], sizes = [2, 91], strides = [1, 1]} : vector<2x100xf32> to vector<2x91xf32>
    %123 = vector.extract_strided_slice %106 {offsets = [0, 0], sizes = [2, 9], strides = [1, 1]} : vector<2x100xf32> to vector<2x9xf32>
    %124 = tpu.concatenate %122, %123 in 1 : vector<2x91xf32>, vector<2x9xf32> -> vector<2x100xf32>
    %125 = vector.extract_strided_slice %106 {offsets = [0, 10], sizes = [2, 90], strides = [1, 1]} : vector<2x100xf32> to vector<2x90xf32>
    %126 = vector.extract_strided_slice %106 {offsets = [0, 0], sizes = [2, 10], strides = [1, 1]} : vector<2x100xf32> to vector<2x10xf32>
    %127 = tpu.concatenate %125, %126 in 1 : vector<2x90xf32>, vector<2x10xf32> -> vector<2x100xf32>
    %128 = vector.extract_strided_slice %106 {offsets = [0, 11], sizes = [2, 89], strides = [1, 1]} : vector<2x100xf32> to vector<2x89xf32>
    %129 = vector.extract_strided_slice %106 {offsets = [0, 0], sizes = [2, 11], strides = [1, 1]} : vector<2x100xf32> to vector<2x11xf32>
    %130 = tpu.concatenate %128, %129 in 1 : vector<2x89xf32>, vector<2x11xf32> -> vector<2x100xf32>
    %131 = tpu.concatenate %109, %112, %115, %118, %106, %121, %124, %127, %130 in 0 : vector<2x100xf32>, vector<2x100xf32>, vector<2x100xf32>, vector<2x100xf32>, vector<2x100xf32>, vector<2x100xf32>, vector<2x100xf32>, vector<2x100xf32>, vector<2x100xf32> -> vector<18x100xf32>
    %c0_14 = arith.constant 0 : index
    %c0_15 = arith.constant 0 : index
    %132 = vector.load %arg5[%c0_14, %c0_15] : memref<2x18xf32, #tpu.memory_space<vmem>>, vector<2x18xf32>
    %cst_16 = arith.constant dense<0.000000e+00> : vector<2x100xf32>
    %133 = tpu.matmul %132, %131, %cst_16 {dimension_numbers = #tpu.dot_dimension_numbers<[1], [0], [0], [1], [0, 0, 1, 1], [], []>} : vector<2x18xf32>, vector<18x100xf32>, vector<2x100xf32> -> vector<2x100xf32>
    %c0_17 = arith.constant 0 : index
    %c0_18 = arith.constant 0 : index
    %134 = vector.load %arg6[%c0_17, %c0_18] : memref<2x1xf32, #tpu.memory_space<vmem>>, vector<2x1xf32>
    %135 = vector.broadcast %134 : vector<2x1xf32> to vector<2x100xf32>
    %136 = arith.addf %133, %135 : vector<2x100xf32>
    %cst_19 = arith.constant 0.000000e+00 : f32
    %137 = vector.broadcast %cst_19 : f32 to vector<2x100xf32>
    %138 = arith.maximumf %136, %137 : vector<2x100xf32>
    %c0_20 = arith.constant 0 : index
    %c0_21 = arith.constant 0 : index
    %139 = vector.load %arg7[%c0_20, %c0_21] : memref<8x2xf32, #tpu.memory_space<vmem>>, vector<8x2xf32>
    %cst_22 = arith.constant dense<0.000000e+00> : vector<8x100xf32>
    %140 = tpu.matmul %139, %138, %cst_22 {dimension_numbers = #tpu.dot_dimension_numbers<[1], [0], [0], [1], [0, 0, 1, 1], [], []>} : vector<8x2xf32>, vector<2x100xf32>, vector<8x100xf32> -> vector<8x100xf32>
    %c0_23 = arith.constant 0 : index
    %c0_24 = arith.constant 0 : index
    %141 = vector.load %arg8[%c0_23, %c0_24] : memref<8x1xf32, #tpu.memory_space<vmem>>, vector<8x1xf32>
    %142 = vector.broadcast %141 : vector<8x1xf32> to vector<8x100xf32>
    %143 = arith.addf %140, %142 : vector<8x100xf32>
    %cst_25 = arith.constant 0.000000e+00 : f32
    %144 = vector.broadcast %cst_25 : f32 to vector<8x100xf32>
    %145 = arith.maximumf %143, %144 : vector<8x100xf32>
    %cst_26 = arith.constant 0.000000e+00 : f32
    %146 = vector.broadcast %cst_26 : f32 to vector<4x100xf32>
    %147 = tpu.concatenate %85, %146 in 0 : vector<4x100xf32>, vector<4x100xf32> -> vector<8x100xf32>
    %148 = arith.addf %145, %147 : vector<8x100xf32>
    %c0_27 = arith.constant 0 : index
    %c0_28 = arith.constant 0 : index
    %c0_29 = arith.constant 0 : index
    %149 = vector.load %arg9[%c0_27, %c0_28, %c0_29] : memref<1x8x100xf32, #tpu.memory_space<vmem>>, vector<1x8x100xf32>
    %150 = vector.shape_cast %149 : vector<1x8x100xf32> to vector<8x100xf32>
    %151 = vector.shape_cast %148 : vector<8x100xf32> to vector<1x8x100xf32>
    tpu.vector_store %arg9[%c0_27, %c0_28, %c0_29], %151 {strides = array<i32>} : memref<1x8x100xf32, #tpu.memory_space<vmem>>, vector<1x8x100xf32>,
    return
  }
  func.func @transform_0(%arg0: i32) -> (i32, i32) {
    %c0_i32 = arith.constant 0 : i32
    %c0_i32_0 = arith.constant 0 : i32
    %c0_i32_1 = arith.constant 0 : i32
    return %c0_i32, %c0_i32_0 : i32, i32
  }
  func.func @transform_1(%arg0: i32) -> (i32, i32, i32) {
    %c0_i32 = arith.constant 0 : i32
    %c0_i32_0 = arith.constant 0 : i32
    %c0_i32_1 = arith.constant 0 : i32
    return %arg0, %c0_i32, %c0_i32_0 : i32, i32, i32
  }
  func.func @transform_2(%arg0: i32) -> (i32, i32) {
    %c0_i32 = arith.constant 0 : i32
    %c0_i32_0 = arith.constant 0 : i32
    %c0_i32_1 = arith.constant 0 : i32
    return %c0_i32, %c0_i32_0 : i32, i32
  }
  func.func @transform_3(%arg0: i32) -> (i32, i32) {
    %c0_i32 = arith.constant 0 : i32
    %c0_i32_0 = arith.constant 0 : i32
    %c0_i32_1 = arith.constant 0 : i32
    return %c0_i32, %c0_i32_0 : i32, i32
  }
  func.func @transform_4(%arg0: i32) -> (i32, i32) {
    %c0_i32 = arith.constant 0 : i32
    %c0_i32_0 = arith.constant 0 : i32
    %c0_i32_1 = arith.constant 0 : i32
    return %c0_i32, %c0_i32_0 : i32, i32
  }
  func.func @transform_5(%arg0: i32) -> (i32, i32) {
    %c0_i32 = arith.constant 0 : i32
    %c0_i32_0 = arith.constant 0 : i32
    %c0_i32_1 = arith.constant 0 : i32
    return %c0_i32, %c0_i32_0 : i32, i32
  }
  func.func @transform_6(%arg0: i32) -> (i32, i32) {
    %c0_i32 = arith.constant 0 : i32
    %c0_i32_0 = arith.constant 0 : i32
    %c0_i32_1 = arith.constant 0 : i32
    return %c0_i32, %c0_i32_0 : i32, i32
  }
  func.func @transform_7(%arg0: i32) -> (i32, i32) {
    %c0_i32 = arith.constant 0 : i32
    %c0_i32_0 = arith.constant 0 : i32
    %c0_i32_1 = arith.constant 0 : i32
    return %c0_i32, %c0_i32_0 : i32, i32
  }
  func.func @transform_8(%arg0: i32) -> (i32, i32, i32) {
    %c0_i32 = arith.constant 0 : i32
    %c0_i32_0 = arith.constant 0 : i32
    %c0_i32_1 = arith.constant 0 : i32
    return %arg0, %c0_i32, %c0_i32_0 : i32, i32, i32
  }
  func.func @transform_9(%arg0: i32) -> (i32, i32, i32) {
    %c0_i32 = arith.constant 0 : i32
    %c0_i32_0 = arith.constant 0 : i32
    %c0_i32_1 = arith.constant 0 : i32
    return %arg0, %c0_i32, %c0_i32_0 : i32, i32, i32
  }
}

</mosaic_0001>

<llo_original>
// kernel: tpu_custom_call.1
$region0: #{tpu_custom_call.1}
  #allocation0 [shape = 'u32[]', space=smem, size = 0x4, offset = 0x4, fixed_abs, tag = 'smem constant byte address 0x4 - core index']
  #allocation1 [shape = 'u32[72,128]{1,0:T(1,128)}', space=vmem, size = 0x9000, scoped, tag = 'internal scratch']
  %s0 = inlined_call_operand.vmem [shape: s32[1,100], index: 0, kind: input, shape index: {}]
  %s1 = inlined_call_operand.hbm [shape: f32[2,16,100], index: 1, kind: input, shape index: {}]
  %s2 = inlined_call_operand.vmem [shape: f32[2,16], index: 2, kind: input, shape index: {}]
  %s3 = inlined_call_operand.vmem [shape: f32[2,1], index: 3, kind: input, shape index: {}]
  %s4 = inlined_call_operand.vmem [shape: f32[2,18], index: 4, kind: input, shape index: {}]
  %s5 = inlined_call_operand.vmem [shape: f32[2,1], index: 5, kind: input, shape index: {}]
  %s6 = inlined_call_operand.vmem [shape: f32[8,2], index: 6, kind: input, shape index: {}]
  %s7 = inlined_call_operand.vmem [shape: f32[8,1], index: 7, kind: input, shape index: {}]
  %s8 = inlined_call_operand.hbm [shape: f32[2,8,100], index: 8, kind: output, shape index: {0}]
  %s9 = inlined_call_operand.hbm [shape: s32[2,4,100], index: 9, kind: output, shape index: {1}]
  %10 = xla_tuple %s8, %s9
  %s11 = sld [smem:[#allocation0]]
  $region77: #{tpu_custom_call.1} parent=0
    _
  %s13 = ssub.s32 1, %s11
  %s14 = scalar_select 0, %s13, %s11
  $region1: #{tpu_custom_call.1} parent=0
    #allocation2 [shape = 'u8[16384]{0}', space=vmem, size = 0x4000, scoped, tag = 'input window, operand 1']
    #allocation3 [shape = 's32[2]{0}', space=sflag, size = 0x8, scoped, tag = 'scoped memory for tpu_custom_call.1']
    #allocation4 [shape = 's32[2]{0}', space=sflag, size = 0x8, scoped, tag = 'scoped memory for tpu_custom_call.1']
    #allocation5 [shape = 'u8[8192]{0}', space=vmem, size = 0x2000, scoped, tag = 'output window, operand 0']
    #allocation6 [shape = 'u8[4096]{0}', space=vmem, size = 0x1000, scoped, tag = 'output window, operand 1']
    #allocation7 [shape = 's32[2]{0}', space=sflag, size = 0x8, scoped, tag = 'scoped memory for tpu_custom_call.1']
    %15 = vsyncpa [#allocation3], 0
    %s16 = scalar_lea.sflag [#allocation3], 1
    %17 = vsyncpa %s16, 0
    %18 = vsyncpa [#allocation4], 0
    %s19 = scalar_lea.sflag [#allocation4], 1
    %20 = vsyncpa %s19, 0
    %21 = vsyncpa [#allocation7], 0
    %s22 = scalar_lea.sflag [#allocation7], 1
    %23 = vsyncpa %s22, 0
    loop: start=0, step=1, limit=4
    $region2: #{tpu_custom_call.1} parent=1 // loop_pre_header
      _
    $region3: #{tpu_custom_call.1} parent=1 // loop_header
      %s25 = sphi 0, %s29
      %p26 = scmp.ge.s32.totalorder %s25, 4
      %s33 = sphi 0, %s33
      %s35 = sphi 0, %s33
      %s36 = sphi 0, %s35
      %s50 = sphi 0, %s36
      %s56 = sphi 0, %s58
      %s59 = sphi 0, %s56
      %s60 = sphi 0, %s59
      %s76 = sphi 0, %s60
      %s80 = sphi 0, %s80
      %s82 = sphi 0, %s80
      %s83 = sphi 0, %s82
      %s97 = sphi 0, %s83
      %s101 = sphi 0, %s101
      %s103 = sphi 0, %s101
      %s104 = sphi 0, %s103
      %s118 = sphi 0, %s104
      %s122 = sphi 0, %s122
      %s124 = sphi 0, %s122
      %s125 = sphi 0, %s124
      %s139 = sphi 0, %s125
      %s143 = sphi 0, %s143
      %s145 = sphi 0, %s143
      %s146 = sphi 0, %s145
      %s160 = sphi 0, %s146
      %s164 = sphi 0, %s164
      %s166 = sphi 0, %s164
      %s167 = sphi 0, %s166
      %s181 = sphi 0, %s167
      %s185 = sphi 0, %s185
      %s187 = sphi 0, %s185
      %s188 = sphi 0, %s187
      %s202 = sphi 0, %s188
      %s208 = sphi 0, %s210
      %s211 = sphi 0, %s208
      %s212 = sphi 0, %s211
      %s228 = sphi 0, %s212
      %s234 = sphi 0, %s236
      %s237 = sphi 0, %s234
      %s238 = sphi 0, %s237
      %s254 = sphi 0, %s238
    $region4: #{tpu_custom_call.1} parent=1 // loop_header_branch
      %28 = sbr.rel (%p26) target = $region8
    $region5: #{tpu_custom_call.1} parent=1 // loop_body
      %s30 = ssub.s32 %s25, 1
      %s31 = ssub.s32 %s25, 2
      %s32 = sadd.s32 %s25, 1
      %s34 = sadd.s32 %s33, 1
      %p37 = scmp.eq.s32.totalorder %s25, 1
      %p38 = scmp.ne.s32.totalorder %s33, %s35
      %p39 = scmp.eq.s32.totalorder %s25, 0
      %p40 = por %p38, %p39
      %p41 = scmp.ne.s32.totalorder %s33, %s35
      %p42 = scmp.eq.s32.totalorder %s30, 1
      %p43 = por %p41, %p42
      %p44 = scmp.ne.s32.totalorder %s35, %s36
      %p45 = scmp.eq.s32.totalorder %s30, 0
      %p46 = por %p44, %p45
      %p47 = scmp.ne.s32.totalorder %s35, %s36
      %p48 = scmp.eq.s32.totalorder %s31, 1
      %p49 = por %p47, %p48
      %p51 = scmp.ne.s32.totalorder %s36, %s50
      %p52 = scmp.eq.s32.totalorder %s31, 0
      %p53 = por %p51, %p52
      %s54 = ssub.s32 %s25, %s32
      %p55 = scmp.eq.s32.totalorder %s54, 0
      %s57 = sadd.s32 %s56, 1
      %s58 = scalar_select %p55, %s56, %s57
      %p61 = pneg %p55
      %p62 = scmp.eq.s32.totalorder %s25, 1
      %p63 = por %p61, %p62
      %p64 = scmp.ne.s32.totalorder %s56, %s59
      %p65 = scmp.eq.s32.totalorder %s25, 0
      %p66 = por %p64, %p65
      %p67 = scmp.ne.s32.totalorder %s56, %s59
      %p68 = scmp.eq.s32.totalorder %s30, 1
      %p69 = por %p67, %p68
      %p70 = scmp.ne.s32.totalorder %s59, %s60
      %p71 = scmp.eq.s32.totalorder %s30, 0
      %p72 = por %p70, %p71
      %p73 = scmp.ne.s32.totalorder %s59, %s60
      %p74 = scmp.eq.s32.totalorder %s31, 1
      %p75 = por %p73, %p74
      %p77 = scmp.ne.s32.totalorder %s60, %s76
      %p78 = scmp.eq.s32.totalorder %s31, 0
      %p79 = por %p77, %p78
      %s81 = sadd.s32 %s80, 1
      %p84 = scmp.eq.s32.totalorder %s25, 1
      %p85 = scmp.ne.s32.totalorder %s80, %s82
      %p86 = scmp.eq.s32.totalorder %s25, 0
      %p87 = por %p85, %p86
      %p88 = scmp.ne.s32.totalorder %s80, %s82
      %p89 = scmp.eq.s32.totalorder %s30, 1
      %p90 = por %p88, %p89
      %p91 = scmp.ne.s32.totalorder %s82, %s83
      %p92 = scmp.eq.s32.totalorder %s30, 0
      %p93 = por %p91, %p92
      %p94 = scmp.ne.s32.totalorder %s82, %s83
      %p95 = scmp.eq.s32.totalorder %s31, 1
      %p96 = por %p94, %p95
      %p98 = scmp.ne.s32.totalorder %s83, %s97
      %p99 = scmp.eq.s32.totalorder %s31, 0
      %p100 = por %p98, %p99
      %s102 = sadd.s32 %s101, 1
      %p105 = scmp.eq.s32.totalorder %s25, 1
      %p106 = scmp.ne.s32.totalorder %s101, %s103
      %p107 = scmp.eq.s32.totalorder %s25, 0
      %p108 = por %p106, %p107
      %p109 = scmp.ne.s32.totalorder %s101, %s103
      %p110 = scmp.eq.s32.totalorder %s30, 1
      %p111 = por %p109, %p110
      %p112 = scmp.ne.s32.totalorder %s103, %s104
      %p113 = scmp.eq.s32.totalorder %s30, 0
      %p114 = por %p112, %p113
      %p115 = scmp.ne.s32.totalorder %s103, %s104
      %p116 = scmp.eq.s32.totalorder %s31, 1
      %p117 = por %p115, %p116
      %p119 = scmp.ne.s32.totalorder %s104, %s118
      %p120 = scmp.eq.s32.totalorder %s31, 0
      %p121 = por %p119, %p120
      %s123 = sadd.s32 %s122, 1
      %p126 = scmp.eq.s32.totalorder %s25, 1
      %p127 = scmp.ne.s32.totalorder %s122, %s124
      %p128 = scmp.eq.s32.totalorder %s25, 0
      %p129 = por %p127, %p128
      %p130 = scmp.ne.s32.totalorder %s122, %s124
      %p131 = scmp.eq.s32.totalorder %s30, 1
      %p132 = por %p130, %p131
      %p133 = scmp.ne.s32.totalorder %s124, %s125
      %p134 = scmp.eq.s32.totalorder %s30, 0
      %p135 = por %p133, %p134
      %p136 = scmp.ne.s32.totalorder %s124, %s125
      %p137 = scmp.eq.s32.totalorder %s31, 1
      %p138 = por %p136, %p137
      %p140 = scmp.ne.s32.totalorder %s125, %s139
      %p141 = scmp.eq.s32.totalorder %s31, 0
      %p142 = por %p140, %p141
      %s144 = sadd.s32 %s143, 1
      %p147 = scmp.eq.s32.totalorder %s25, 1
      %p148 = scmp.ne.s32.totalorder %s143, %s145
      %p149 = scmp.eq.s32.totalorder %s25, 0
      %p150 = por %p148, %p149
      %p151 = scmp.ne.s32.totalorder %s143, %s145
      %p152 = scmp.eq.s32.totalorder %s30, 1
      %p153 = por %p151, %p152
      %p154 = scmp.ne.s32.totalorder %s145, %s146
      %p155 = scmp.eq.s32.totalorder %s30, 0
      %p156 = por %p154, %p155
      %p157 = scmp.ne.s32.totalorder %s145, %s146
      %p158 = scmp.eq.s32.totalorder %s31, 1
      %p159 = por %p157, %p158
      %p161 = scmp.ne.s32.totalorder %s146, %s160
      %p162 = scmp.eq.s32.totalorder %s31, 0
      %p163 = por %p161, %p162
      %s165 = sadd.s32 %s164, 1
      %p168 = scmp.eq.s32.totalorder %s25, 1
      %p169 = scmp.ne.s32.totalorder %s164, %s166
      %p170 = scmp.eq.s32.totalorder %s25, 0
      %p171 = por %p169, %p170
      %p172 = scmp.ne.s32.totalorder %s164, %s166
      %p173 = scmp.eq.s32.totalorder %s30, 1
      %p174 = por %p172, %p173
      %p175 = scmp.ne.s32.totalorder %s166, %s167
      %p176 = scmp.eq.s32.totalorder %s30, 0
      %p177 = por %p175, %p176
      %p178 = scmp.ne.s32.totalorder %s166, %s167
      %p179 = scmp.eq.s32.totalorder %s31, 1
      %p180 = por %p178, %p179
      %p182 = scmp.ne.s32.totalorder %s167, %s181
      %p183 = scmp.eq.s32.totalorder %s31, 0
      %p184 = por %p182, %p183
      %s186 = sadd.s32 %s185, 1
      %p189 = scmp.eq.s32.totalorder %s25, 1
      %p190 = scmp.ne.s32.totalorder %s185, %s187
      %p191 = scmp.eq.s32.totalorder %s25, 0
      %p192 = por %p190, %p191
      %p193 = scmp.ne.s32.totalorder %s185, %s187
      %p194 = scmp.eq.s32.totalorder %s30, 1
      %p195 = por %p193, %p194
      %p196 = scmp.ne.s32.totalorder %s187, %s188
      %p197 = scmp.eq.s32.totalorder %s30, 0
      %p198 = por %p196, %p197
      %p199 = scmp.ne.s32.totalorder %s187, %s188
      %p200 = scmp.eq.s32.totalorder %s31, 1
      %p201 = por %p199, %p200
      %p203 = scmp.ne.s32.totalorder %s188, %s202
      %p204 = scmp.eq.s32.totalorder %s31, 0
      %p205 = por %p203, %p204
      %s206 = ssub.s32 %s25, %s32
      %p207 = scmp.eq.s32.totalorder %s206, 0
      %s209 = sadd.s32 %s208, 1
      %s210 = scalar_select %p207, %s208, %s209
      %p213 = pneg %p207
      %p214 = scmp.eq.s32.totalorder %s25, 1
      %p215 = por %p213, %p214
      %p216 = scmp.ne.s32.totalorder %s208, %s211
      %p217 = scmp.eq.s32.totalorder %s25, 0
      %p218 = por %p216, %p217
      %p219 = scmp.ne.s32.totalorder %s208, %s211
      %p220 = scmp.eq.s32.totalorder %s30, 1
      %p221 = por %p219, %p220
      %p222 = scmp.ne.s32.totalorder %s211, %s212
      %p223 = scmp.eq.s32.totalorder %s30, 0
      %p224 = por %p222, %p223
      %p225 = scmp.ne.s32.totalorder %s211, %s212
      %p226 = scmp.eq.s32.totalorder %s31, 1
      %p227 = por %p225, %p226
      %p229 = scmp.ne.s32.totalorder %s212, %s228
      %p230 = scmp.eq.s32.totalorder %s31, 0
      %p231 = por %p229, %p230
      %s232 = ssub.s32 %s25, %s32
      %p233 = scmp.eq.s32.totalorder %s232, 0
      %s235 = sadd.s32 %s234, 1
      %s236 = scalar_select %p233, %s234, %s235
      %p239 = pneg %p233
      %p240 = scmp.eq.s32.totalorder %s25, 1
      %p241 = por %p239, %p240
      %p242 = scmp.ne.s32.totalorder %s234, %s237
      %p243 = scmp.eq.s32.totalorder %s25, 0
      %p244 = por %p242, %p243
      %p245 = scmp.ne.s32.totalorder %s234, %s237
      %p246 = scmp.eq.s32.totalorder %s30, 1
      %p247 = por %p245, %p246
      %p248 = scmp.ne.s32.totalorder %s237, %s238
      %p249 = scmp.eq.s32.totalorder %s30, 0
      %p250 = por %p248, %p249
      %p251 = scmp.ne.s32.totalorder %s237, %s238
      %p252 = scmp.eq.s32.totalorder %s31, 1
      %p253 = por %p251, %p252
      %p255 = scmp.ne.s32.totalorder %s238, %s254
      %p256 = scmp.eq.s32.totalorder %s31, 0
      %p257 = por %p255, %p256
      %p258 = scmp.le.s32.totalorder 1, %s25
      %p259 = scmp.lt.s32.totalorder %s25, 3
      %p260 = pnand %p258, %p259
      %p261 = pneg %p260
      // Predicated region
      $region9: #{tpu_custom_call.1} parent=5 // pred_check
        _
      $region10: #{tpu_custom_call.1} parent=5 // pred_check_branch
        %263 = sbr.rel (%p260) target = $region12
      $region11: #{tpu_custom_call.1} parent=5 // pred_region
        %s264 = ssub.s32 %s25, 1
        // Predicated region
        $region13: #{tpu_custom_call.1} parent=11 // pred_check
          %p265 = pneg %p46
        $region14: #{tpu_custom_call.1} parent=11 // pred_check_branch
          %267 = sbr.rel (%p265) target = $region16
        $region15: #{tpu_custom_call.1} parent=11 // pred_region
          _
        $region16: #{tpu_custom_call.1} parent=11 // pred_fallthru
          _
        // Predicated region
        $region17: #{tpu_custom_call.1} parent=11 // pred_check
          %p268 = pneg %p93
        $region18: #{tpu_custom_call.1} parent=11 // pred_check_branch
          %270 = sbr.rel (%p268) target = $region20
        $region19: #{tpu_custom_call.1} parent=11 // pred_region
          _
        $region20: #{tpu_custom_call.1} parent=11 // pred_fallthru
          _
        // Predicated region
        $region21: #{tpu_custom_call.1} parent=11 // pred_check
          %p271 = pneg %p114
        $region22: #{tpu_custom_call.1} parent=11 // pred_check_branch
          %273 = sbr.rel (%p271) target = $region24
        $region23: #{tpu_custom_call.1} parent=11 // pred_region
          _
        $region24: #{tpu_custom_call.1} parent=11 // pred_fallthru
          _
        // Predicated region
        $region25: #{tpu_custom_call.1} parent=11 // pred_check
          %p274 = pneg %p135
        $region26: #{tpu_custom_call.1} parent=11 // pred_check_branch
          %276 = sbr.rel (%p274) target = $region28
        $region27: #{tpu_custom_call.1} parent=11 // pred_region
          _
        $region28: #{tpu_custom_call.1} parent=11 // pred_fallthru
          _
        // Predicated region
        $region29: #{tpu_custom_call.1} parent=11 // pred_check
          %p277 = pneg %p156
        $region30: #{tpu_custom_call.1} parent=11 // pred_check_branch
          %279 = sbr.rel (%p277) target = $region32
        $region31: #{tpu_custom_call.1} parent=11 // pred_region
          _
        $region32: #{tpu_custom_call.1} parent=11 // pred_fallthru
          _
        // Predicated region
        $region33: #{tpu_custom_call.1} parent=11 // pred_check
          %p280 = pneg %p177
        $region34: #{tpu_custom_call.1} parent=11 // pred_check_branch
          %282 = sbr.rel (%p280) target = $region36
        $region35: #{tpu_custom_call.1} parent=11 // pred_region
          _
        $region36: #{tpu_custom_call.1} parent=11 // pred_fallthru
          _
        // Predicated region
        $region37: #{tpu_custom_call.1} parent=11 // pred_check
          %p283 = pneg %p198
        $region38: #{tpu_custom_call.1} parent=11 // pred_check_branch
          %285 = sbr.rel (%p283) target = $region40
        $region39: #{tpu_custom_call.1} parent=11 // pred_region
          _
        $region40: #{tpu_custom_call.1} parent=11 // pred_fallthru
          _
      $region12: #{tpu_custom_call.1} parent=5 // pred_fallthru
        _
      %p286 = scmp.lt.s32.totalorder %s25, 2
      // Predicated region
      $region41: #{tpu_custom_call.1} parent=5 // pred_check
        %p287 = pneg %p286
      $region42: #{tpu_custom_call.1} parent=5 // pred_check_branch
        %289 = sbr.rel (%p287) target = $region44
      $region43: #{tpu_custom_call.1} parent=5 // pred_region
        // Predicated region
        $region45: #{tpu_custom_call.1} parent=43 // pred_check
          %p290 = pneg %p66
        $region46: #{tpu_custom_call.1} parent=43 // pred_check_branch
          %292 = sbr.rel (%p290) target = $region48
        $region47: #{tpu_custom_call.1} parent=43 // pred_region
          %s293 = sand.u32 %s56, 1
          %s294 = scalar_lea.sflag [#allocation3], %s293
          %s295 = sand.u32 %s56, 1
          %s296 = smul.addr %s295, 16
          %s297 = scalar_lea.vmem [#allocation2], %s296
          %299 = vsyncadd %s294, 0
          %s300 = smul.addr %s25, 2
          %s301 = smul.addr %s300, 8
          %s302 = scalar_lea.hbm %s1, %s301
          %s303 = sshll.u32 %s302, 4
          %s304 = int_to_ptr.hbm [resolvable:$true] %s303
          %s305 = sshll.u32 %s297, 4
          %s306 = int_to_ptr.vmem [resolvable:$true] %s305
          %311 = dma.hbm_to_vmem [thread:$0]  %s304, 256, %s306, %s294, 128, 128, 8
        $region48: #{tpu_custom_call.1} parent=43 // pred_fallthru
          _
      $region44: #{tpu_custom_call.1} parent=5 // pred_fallthru
        _
      %p312 = scmp.le.s32.totalorder 1, %s25
      %p313 = scmp.lt.s32.totalorder %s25, 3
      %p314 = pnand %p312, %p313
      %p315 = pneg %p314
      // Predicated region
      $region49: #{tpu_custom_call.1} parent=5 // pred_check
        _
      $region50: #{tpu_custom_call.1} parent=5 // pred_check_branch
        %317 = sbr.rel (%p314) target = $region52
      $region51: #{tpu_custom_call.1} parent=5 // pred_region
        %s318 = ssub.s32 %s25, 1
        %s319 = sand.u32 %s59, 1
        %s320 = scalar_lea.sflag [#allocation3], %s319
        %s321 = sand.u32 %s59, 1
        %s322 = smul.addr %s321, 16
        %s323 = scalar_lea.vmem [#allocation2], %s322
        // Predicated region
        $region53: #{tpu_custom_call.1} parent=51 // pred_check
          %p324 = pneg %p72
        $region54: #{tpu_custom_call.1} parent=51 // pred_check_branch
          %326 = sbr.rel (%p324) target = $region56
        $region55: #{tpu_custom_call.1} parent=51 // pred_region
          %328 = dma.done %s320, 256
        $region56: #{tpu_custom_call.1} parent=51 // pred_fallthru
          _
        %p329 = pneg %p46
        %p330 = pneg %p43
        %s331 = sand.u32 %s59, 1
        %s332 = scalar_lea.sflag [#allocation3], %s331
        %s333 = sand.u32 %s59, 1
        %s334 = smul.addr %s333, 16
        %s335 = scalar_lea.vmem [#allocation2], %s334
        %p336 = pneg %p72
        %p337 = pneg %p69
        %p338 = pneg %p93
        %p339 = pneg %p90
        %p340 = pneg %p114
        %p341 = pneg %p111
        %p342 = pneg %p135
        %p343 = pneg %p132
        %p344 = pneg %p156
        %p345 = pneg %p153
        %p346 = pneg %p177
        %p347 = pneg %p174
        %p348 = pneg %p198
        %p349 = pneg %p195
        %p350 = pneg %p224
        %p351 = pneg %p221
        %s352 = sand.u32 %s211, 1
        %s353 = scalar_lea.sflag [#allocation4], %s352
        %s354 = sand.u32 %s211, 1
        %s355 = smul.addr %s354, 8
        %s356 = scalar_lea.vmem [#allocation5], %s355
        %p357 = pneg %p250
        %p358 = pneg %p247
        %s359 = sand.u32 %s237, 1
        %s360 = scalar_lea.sflag [#allocation7], %s359
        %s361 = sand.u32 %s237, 1
        %s362 = smul.addr %s361, 4
        %s363 = scalar_lea.vmem [#allocation6], %s362
        %v364 = vld [vmem:[%s323] sm:$0xff]
        %v365 = vld [vmem:[%s323 + $0x8] sm:$0xff]
        %v366 = vld [vmem:[%s0] sm:$0x1]
        %vm367 = vcmp.ge.s32.totalorder %v366, 0
        %369 = vrot.lane.b32.xlu0 %v365, 39
        %v370 = vpop.permute.xlu0 %369
        %372 = vrot.lane.b32.xlu0 %v365, 11
        %v373 = vpop.permute.xlu0 %372
        %vm375 = vcmask 89088
        %v376 = vsel %vm375, %v370, %v373
        %v377 = vadd.s32 %v366, 4294967245
        %v378 = vperm.slane %v377, 0
        %379 = vrot.lane.b32.xlu0 %v365, 38
        %v380 = vpop.permute.xlu0 %379
        %382 = vrot.lane.b32.xlu0 %v365, 10
        %v383 = vpop.permute.xlu0 %382
        %vm385 = vcmask 80896
        %v386 = vsel %vm385, %v380, %v383
        %v387 = vadd.s32 %v366, 4294967246
        %v389 = vrot.slane %v376, 4
        %vm391 = vcmp.gt.f32.partialorder %v386, %v389
        %v392 = vsel %vm391, %v386, %v389
        %v393 = vperm.slane %v387, 0
        %v394 = vsel %vm391, %v393, %v378
        %v395 = vadd.s32 %v366, 4294967247
        %v397 = vrot.slane %v392, 4
        %vm399 = vcmp.gt.f32.partialorder %v386, %v397
        %v400 = vsel %vm399, %v386, %v397
        %v401 = vperm.slane %v395, 0
        %v402 = vrot.slane %v394, 4
        %v403 = vsel %vm399, %v401, %v402
        %405 = vrot.lane.b32.xlu0 %v364, 29
        %v406 = vpop.permute.xlu0 %405
        %408 = vrot.lane.b32.xlu0 %v364, 1
        %v409 = vpop.permute.xlu0 %408
        %vm411 = vcmask 7168
        %v412 = vsel %vm411, %v406, %v409
        %v413 = vadd.s32 %v366, 4294967261
        %vm414 = vcmp.gt.f32.partialorder %v412, %v400
        %v415 = vsel %vm414, %v412, %v400
        %v416 = vperm.slane %v413, 0
        %v417 = vsel %vm414, %v416, %v403
        %v418 = vadd.s32 %v366, 4294967262
        %v420 = vrot.slane %v415, 4
        %vm422 = vcmp.gt.f32.partialorder %v364, %v420
        %v423 = vsel %vm422, %v364, %v420
        %v424 = vperm.slane %v418, 0
        %v425 = vrot.slane %v417, 4
        %v426 = vsel %vm422, %v424, %v425
        %v427 = vadd.s32 %v366, 4294967263
        %v429 = vrot.slane %v423, 4
        %vm431 = vcmp.gt.f32.partialorder %v364, %v429
        %v432 = vsel %vm431, %v364, %v429
        %v433 = vperm.slane %v427, 0
        %v434 = vrot.slane %v426, 4
        %v435 = vsel %vm431, %v433, %v434
        %436 = vrot.lane.b32.xlu0 %v365, 29
        %v437 = vpop.permute.xlu0 %436
        %439 = vrot.lane.b32.xlu0 %v365, 1
        %v440 = vpop.permute.xlu0 %439
        %v442 = vsel %vm411, %v437, %v440
        %v443 = vadd.s32 %v366, 4294967277
        %vm444 = vcmp.gt.f32.partialorder %v442, %v432
        %v445 = vsel %vm444, %v442, %v432
        %v446 = vperm.slane %v443, 0
        %v447 = vsel %vm444, %v446, %v435
        %v448 = vadd.s32 %v366, 4294967278
        %v450 = vrot.slane %v445, 4
        %vm452 = vcmp.gt.f32.partialorder %v365, %v450
        %v453 = vsel %vm452, %v365, %v450
        %v454 = vperm.slane %v448, 0
        %v455 = vrot.slane %v447, 4
        %v456 = vsel %vm452, %v454, %v455
        %v457 = vadd.s32 %v366, 4294967279
        %v459 = vrot.slane %v453, 4
        %vm461 = vcmp.gt.f32.partialorder %v365, %v459
        %v462 = vsel %vm461, %v365, %v459
        %v463 = vperm.slane %v457, 0
        %v464 = vrot.slane %v456, 4
        %v465 = vsel %vm461, %v463, %v464
        %vm466 = vcmask 818180
        %467 = vst.msk [vmem:[%s363 - $0x4] sm:$0xf0] %vm466, %v465
        %v468 = vsel %vm367, 1, 0
        %v469 = vperm.slane %v468, 0
        %vm470 = vcmp.eq.s32.totalorder %v469, 1
        %v471 = vsel %vm470, %v364, 0.0
        %v472 = vsel %vm470, %v365, 0.0
        %v473 = vld [vmem:[%s2] sm:$0x3]
        %v474 = vld [vmem:[%s3] sm:$0x3]
        %476 = vset.pattern.permute.xlu0 0
        %477 = vperm.xlu0 %476, %v474
        %v478 = vpop.permute.xlu0 %477
        %vm480 = vcmask 130048
        %v482 = vsel %vm480, %v473, 0
        %484 = vmatpush.msra.mxu0 0.0
        %485 = vmatpush.msra.mxu0 0.0
        %486 = vmatpush.msra.mxu0 0.0
        %487 = vmatpush.msra.mxu0 0.0
        %488 = vmatpush.msra.mxu0 0.0
        %489 = vmatpush.msra.mxu0 0.0
        %490 = vmatpush.msra.mxu0 0.0
        %491 = vmatpush.msra.mxu0 0.0
        %492 = vmatpush.msra.mxu0 0.0
        %493 = vmatpush.msra.mxu0 0.0
        %494 = vmatpush.msra.mxu0 0.0
        %495 = vmatpush.msra.mxu0 0.0
        %496 = vmatpush.msra.mxu0 0.0
        %497 = vmatpush.msra.mxu0 0.0
        %498 = vmatpush.msra.mxu0 %v472
        %499 = vmatpush.msra.mxu0 %v471
        %500 = vmatmul.f32.gmra.mxu0 %v482
        %v501 = vpop.f32.mrf.mxu0
        %v502 = vadd.f32 %v478, %v501
        %503 = vdwg.mxu0
        %v504 = vmax.f32 %v502, 0.0
        %v505 = vsel %vm470, %v504, 0.0
        %507 = vrot.lane.b32.xlu0 %v505, 39
        %v508 = vpop.permute.xlu0 %507
        %510 = vrot.lane.b32.xlu0 %v505, 11
        %v511 = vpop.permute.xlu0 %510
        %v513 = vsel %vm375, %v508, %v511
        %514 = vrot.lane.b32.xlu0 %v505, 38
        %v515 = vpop.permute.xlu0 %514
        %517 = vrot.lane.b32.xlu0 %v505, 10
        %v518 = vpop.permute.xlu0 %517
        %v520 = vsel %vm385, %v515, %v518
        %521 = vrot.lane.b32.xlu0 %v505, 37
        %v522 = vpop.permute.xlu0 %521
        %524 = vrot.lane.b32.xlu0 %v505, 9
        %v525 = vpop.permute.xlu0 %524
        %vm527 = vcmask 72704
        %v528 = vsel %vm527, %v522, %v525
        %529 = vrot.lane.b32.xlu0 %v505, 29
        %v530 = vpop.permute.xlu0 %529
        %532 = vrot.lane.b32.xlu0 %v505, 1
        %v533 = vpop.permute.xlu0 %532
        %v535 = vsel %vm411, %v530, %v533
        %536 = vrot.lane.b32.xlu0 %v505, 127
        %v537 = vpop.permute.xlu0 %536
        %539 = vrot.lane.b32.xlu0 %v505, 99
        %v540 = vpop.permute.xlu0 %539
        %vm542 = vcmask 809984
        %v543 = vsel %vm542, %v537, %v540
        %544 = vrot.lane.b32.xlu0 %v505, 119
        %v545 = vpop.permute.xlu0 %544
        %547 = vrot.lane.b32.xlu0 %v505, 91
        %v548 = vpop.permute.xlu0 %547
        %vm550 = vcmask 744448
        %v551 = vsel %vm550, %v545, %v548
        %552 = vrot.lane.b32.xlu0 %v505, 118
        %v553 = vpop.permute.xlu0 %552
        %555 = vrot.lane.b32.xlu0 %v505, 90
        %v556 = vpop.permute.xlu0 %555
        %vm558 = vcmask 736256
        %v559 = vsel %vm558, %v553, %v556
        %560 = vrot.lane.b32.xlu0 %v505, 117
        %v561 = vpop.permute.xlu0 %560
        %563 = vrot.lane.b32.xlu0 %v505, 89
        %v564 = vpop.permute.xlu0 %563
        %vm566 = vcmask 728064
        %v567 = vsel %vm566, %v561, %v564
        %v569 = vrot.slane %v520, 6
        %v572 = vrot.slane %v528, 4
        %v575 = vrot.slane %v535, 2
        %v578 = vrot.slane %v543, 6
        %v581 = vrot.slane %v551, 4
        %v584 = vrot.slane %v559, 2
        %vm586 = vcmask 1041408
        %v587 = vsel %vm586, %v513, %v569
        %vm588 = vcmask 1043456
        %v589 = vsel %vm588, %v587, %v572
        %vm590 = vcmask 1045504
        %v591 = vsel %vm590, %v589, %v575
        %v592 = vsel %vm586, %v505, %v578
        %v593 = vsel %vm588, %v592, %v581
        %v594 = vsel %vm590, %v593, %v584
        %v595 = vld [vmem:[%s4] sm:$0x3]
        %v596 = vld [vmem:[%s5] sm:$0x3]
        %598 = vset.pattern.permute.xlu0 0
        %599 = vperm.xlu0 %598, %v596
        %v600 = vpop.permute.xlu0 %599
        %vm602 = vcmask 146432
        %v604 = vsel %vm602, %v595, 0
        %v607 = vsel %vm586, %v567, 0
        %609 = vmatpush.msra.mxu0 0.0
        %610 = vmatpush.msra.mxu0 0.0
        %611 = vmatpush.msra.mxu0 0.0
        %612 = vmatpush.msra.mxu0 0.0
        %613 = vmatpush.msra.mxu0 0.0
        %614 = vmatpush.msra.mxu0 0.0
        %615 = vmatpush.msra.mxu0 0.0
        %616 = vmatpush.msra.mxu0 0.0
        %617 = vmatpush.msra.mxu0 0.0
        %618 = vmatpush.msra.mxu0 0.0
        %619 = vmatpush.msra.mxu0 0.0
        %620 = vmatpush.msra.mxu0 0.0
        %621 = vmatpush.msra.mxu0 0.0
        %622 = vmatpush.msra.mxu0 %v607
        %623 = vmatpush.msra.mxu0 %v594
        %624 = vmatpush.msra.mxu0 %v591
        %625 = vmatmul.f32.gmra.mxu0 %v604
        %v626 = vpop.f32.mrf.mxu0
        %v627 = vadd.f32 %v600, %v626
        %628 = vdwg.mxu0
        %v629 = vmax.f32 %v627, 0.0
        %v630 = vld [vmem:[%s6] sm:$0xff]
        %v631 = vld [vmem:[%s7] sm:$0xff]
        %633 = vset.pattern.permute.xlu0 0
        %634 = vperm.xlu0 %633, %v631
        %v635 = vpop.permute.xlu0 %634
        %vm637 = vcmask 15360
        %v639 = vsel %vm637, %v630, 0
        %v642 = vsel %vm586, %v629, 0
        %644 = vmatpush.msra.mxu0 0.0
        %645 = vmatpush.msra.mxu0 0.0
        %646 = vmatpush.msra.mxu0 0.0
        %647 = vmatpush.msra.mxu0 0.0
        %648 = vmatpush.msra.mxu0 0.0
        %649 = vmatpush.msra.mxu0 0.0
        %650 = vmatpush.msra.mxu0 0.0
        %651 = vmatpush.msra.mxu0 0.0
        %652 = vmatpush.msra.mxu0 0.0
        %653 = vmatpush.msra.mxu0 0.0
        %654 = vmatpush.msra.mxu0 0.0
        %655 = vmatpush.msra.mxu0 0.0
        %656 = vmatpush.msra.mxu0 0.0
        %657 = vmatpush.msra.mxu0 0.0
        %658 = vmatpush.msra.mxu0 0.0
        %659 = vmatpush.msra.mxu0 %v642
        %660 = vmatmul.f32.gmra.mxu0 %v639
        %v661 = vpop.f32.mrf.mxu0
        %v662 = vadd.f32 %v635, %v661
        %663 = vdwg.mxu0
        %v664 = vmax.f32 %v662, 0.0
        %v666 = vrot.slane %v462, 4
        %v668 = vsel %vm588, %v666, 0.0
        %v669 = vadd.f32 %v664, %v668
        %vm670 = vcmask 818176
        %671 = vst.msk [vmem:[%s356] sm:$0xff] %vm670, %v669
        %s672 = sand.u32 %s211, 1
        %s673 = scalar_lea.sflag [#allocation4], %s672
        %s674 = sand.u32 %s211, 1
        %s675 = smul.addr %s674, 8
        %s676 = scalar_lea.vmem [#allocation5], %s675
        %s677 = sand.u32 %s237, 1
        %s678 = scalar_lea.sflag [#allocation7], %s677
        %s679 = sand.u32 %s237, 1
        %s680 = smul.addr %s679, 4
        %s681 = scalar_lea.vmem [#allocation6], %s680
        // Predicated region
        $region57: #{tpu_custom_call.1} parent=51 // pred_check
          %p682 = pneg %p221
        $region58: #{tpu_custom_call.1} parent=51 // pred_check_branch
          %684 = sbr.rel (%p682) target = $region60
        $region59: #{tpu_custom_call.1} parent=51 // pred_region
          %686 = vsyncadd %s673, 0
          %s687 = smul.addr %s30, 8
          %s688 = scalar_lea.hbm %s8, %s687
          %s690 = sshll.u32 %s676, 4
          %s691 = int_to_ptr.vmem [resolvable:$true] %s690
          %s692 = sshll.u32 %s688, 4
          %s693 = int_to_ptr.hbm [resolvable:$true] %s692
          %695 = dma.vmem_to_hbm [thread:$0]  %s691, 128, %s693, %s673
        $region60: #{tpu_custom_call.1} parent=51 // pred_fallthru
          _
        // Predicated region
        $region61: #{tpu_custom_call.1} parent=51 // pred_check
          %p696 = pneg %p247
        $region62: #{tpu_custom_call.1} parent=51 // pred_check_branch
          %698 = sbr.rel (%p696) target = $region64
        $region63: #{tpu_custom_call.1} parent=51 // pred_region
          %700 = vsyncadd %s678, 0
          %s701 = smul.addr %s30, 4
          %s702 = scalar_lea.hbm %s9, %s701
          %s704 = sshll.u32 %s681, 4
          %s705 = int_to_ptr.vmem [resolvable:$true] %s704
          %s706 = sshll.u32 %s702, 4
          %s707 = int_to_ptr.hbm [resolvable:$true] %s706
          %709 = dma.vmem_to_hbm [thread:$0]  %s705, 64, %s707, %s678
        $region64: #{tpu_custom_call.1} parent=51 // pred_fallthru
          _
      $region52: #{tpu_custom_call.1} parent=5 // pred_fallthru
        _
      %p710 = scmp.le.s32.totalorder 2, %s25
      // Predicated region
      $region65: #{tpu_custom_call.1} parent=5 // pred_check
        %p711 = pneg %p710
      $region66: #{tpu_custom_call.1} parent=5 // pred_check_branch
        %713 = sbr.rel (%p711) target = $region68
      $region67: #{tpu_custom_call.1} parent=5 // pred_region
        %s714 = ssub.s32 %s25, 2
        // Predicated region
        $region69: #{tpu_custom_call.1} parent=67 // pred_check
          %p715 = pneg %p227
        $region70: #{tpu_custom_call.1} parent=67 // pred_check_branch
          %717 = sbr.rel (%p715) target = $region72
        $region71: #{tpu_custom_call.1} parent=67 // pred_region
          %s718 = sand.u32 %s212, 1
          %s719 = scalar_lea.sflag [#allocation4], %s718
          %s720 = sand.u32 %s212, 1
          %s721 = smul.addr %s720, 8
          %s722 = scalar_lea.vmem [#allocation5], %s721
          %724 = dma.done %s719, 128
        $region72: #{tpu_custom_call.1} parent=67 // pred_fallthru
          _
        // Predicated region
        $region73: #{tpu_custom_call.1} parent=67 // pred_check
          %p725 = pneg %p253
        $region74: #{tpu_custom_call.1} parent=67 // pred_check_branch
          %727 = sbr.rel (%p725) target = $region76
        $region75: #{tpu_custom_call.1} parent=67 // pred_region
          %s728 = sand.u32 %s238, 1
          %s729 = scalar_lea.sflag [#allocation7], %s728
          %s730 = sand.u32 %s238, 1
          %s731 = smul.addr %s730, 4
          %s732 = scalar_lea.vmem [#allocation6], %s731
          %734 = dma.done %s729, 64
        $region76: #{tpu_custom_call.1} parent=67 // pred_fallthru
          _
      $region68: #{tpu_custom_call.1} parent=5 // pred_fallthru
        _
    $region6: #{tpu_custom_call.1} parent=1 // loop_footer
      %s29 = sadd.s32 1, %s25
    $region7: #{tpu_custom_call.1} parent=1 // loop_footer_branch
      %24 = sbr.rel target = $region3
    $region8: #{tpu_custom_call.1} parent=1 // loop_exit
      _
    %735 = vsyncpa [#allocation3], 1
    %s736 = scalar_lea.sflag [#allocation3], 1
    %737 = vsyncpa %s736, 1
    %738 = vsyncpa [#allocation4], 1
    %s739 = scalar_lea.sflag [#allocation4], 1
    %740 = vsyncpa %s739, 1
    %741 = vsyncpa [#allocation7], 1
    %s742 = scalar_lea.sflag [#allocation7], 1
    %743 = vsyncpa %s742, 1

</llo_original>
